<compile_context>
chip_gen: v5e
topology: v5e:2x2
jax: 0.10.0
libtpu: 0.0.40
codegen_flags: <defaults>
</compile_context>

<pallas_src>
import jax
import jax.numpy as jnp
from jax.experimental import pallas as pl
from jax.experimental.pallas import tpu as pltpu

_NEG_LARGE = -1e30  # "minus infinity" for padded logit columns (finite to avoid inf-inf)


def _mlp_kernel(x_ref, w1_ref, b1_ref, w2_ref, b2_ref, o_ref):
    # x_ref : (TB, D_in)       bf16
    # w1_ref: (D_in, H)        bf16     b1_ref: (1, H)        f32
    # w2_ref: (H, D_out_p)     bf16     b2_ref: (1, D_out_p)  f32 (-1e30 in padded cols)
    # o_ref : (TB, D_out_p)    f32
    x = x_ref[...]

    # layer_input: Linear(dim_in, dim_hidden) — bf16 operands, f32 accumulate on MXU.
    h = jnp.dot(x, w1_ref[...], preferred_element_type=jnp.float32) + b1_ref[...]

    # Dropout: nn.Dropout() at inference time is the identity.
    # TODO(synk): training-mode dropout (p=0.5 mask + 1/(1-p) scale via pltpu.prng_*)
    #             intentionally omitted; eval semantics reproduced exactly.

    # ReLU (PyTorch applies dropout before relu; order is irrelevant in eval).
    h = jnp.maximum(h, 0.0)

    # layer_hidden: Linear(dim_hidden, dim_out_padded).
    logits = jnp.dot(h.astype(w2_ref.dtype), w2_ref[...],
                     preferred_element_type=jnp.float32) + b2_ref[...]
    # Padded columns carry bias -1e30 -> exp() == 0, so they don't perturb the softmax.

    # Softmax over dim=1, numerically stabilized; divide via EUP approx reciprocal.
    m = jnp.max(logits, axis=1, keepdims=True)
    e = jnp.exp(logits - m)
    s = jnp.sum(e, axis=1, keepdims=True)
    o_ref[...] = (e * pl.reciprocal(s, approx=True)).astype(o_ref.dtype)


def _round_up(v, m):
    return (v + m - 1) // m * m


def mlp_forward(x_nchw, w1, b1, w2, b2, *, block_b=512):
    """x_nchw: (B, C, H, W).  w1: (D_in, H), b1: (H,), w2: (H, D_out), b2: (D_out,)."""
    B = x_nchw.shape[0]
    d_in = x_nchw.shape[1] * x_nchw.shape[-2] * x_nchw.shape[-1]
    d_hidden = w1.shape[1]
    d_out = w2.shape[1]

    # x.view(-1, C*H*W); cast activations to bf16 to halve HBM read traffic.
    x2d = x_nchw.reshape(B, d_in).astype(jnp.bfloat16)

    # Batch tile: multiple of 8 (sublane granule), up to block_b (512 keeps the
    # double-buffered x tiles at ~1 MiB each for d_in=1024 and hits ~85% of HBM BW).
    tb = min(block_b, _round_up(B, 8))
    b_pad = _round_up(B, tb)
    if b_pad != B:
        x2d = jnp.pad(x2d, ((0, b_pad - B), (0, 0)))  # padded rows are zeros

    # Pad class dim to 128 lanes -> unmasked (lane-dense) output stores.
    d_out_p = _round_up(d_out, 128)
    w1_b = w1.astype(jnp.bfloat16)
    b1_f = b1.reshape(1, d_hidden).astype(jnp.float32)
    w2_b = jnp.zeros((d_hidden, d_out_p), jnp.bfloat16).at[:, :d_out].set(
        w2.astype(jnp.bfloat16))
    b2_f = jnp.full((1, d_out_p), _NEG_LARGE, jnp.float32).at[0, :d_out].set(
        b2.astype(jnp.float32))

    grid = (b_pad // tb,)

    cost = pl.CostEstimate(
        flops=2 * b_pad * (d_in * d_hidden + d_hidden * d_out_p),
        transcendentals=b_pad * d_out_p,
        bytes_accessed=(x2d.size * 2 + w1_b.size * 2 + w2_b.size * 2
                        + b1_f.size * 4 + b2_f.size * 4 + b_pad * d_out_p * 4),
    )

    out = pl.pallas_call(
        _mlp_kernel,
        out_shape=jax.ShapeDtypeStruct((b_pad, d_out_p), jnp.float32),
        grid=grid,
        in_specs=[
            pl.BlockSpec((tb, d_in), lambda i: (i, 0)),            # x: tiled on batch
            pl.BlockSpec((d_in, d_hidden), lambda i: (0, 0)),      # w1: VMEM-resident
            pl.BlockSpec((1, d_hidden), lambda i: (0, 0)),         # b1: VMEM-resident
            pl.BlockSpec((d_hidden, d_out_p), lambda i: (0, 0)),   # w2: VMEM-resident
            pl.BlockSpec((1, d_out_p), lambda i: (0, 0)),          # b2: VMEM-resident
        ],
        out_specs=pl.BlockSpec((tb, d_out_p), lambda i: (i, 0)),
        compiler_params=pltpu.CompilerParams(
            dimension_semantics=("parallel",),   # v7x: shard batch tiles over 2 TCs
            vmem_limit_bytes=32 << 20,           # headroom on v7x's 64 MiB VMEM
        ),
        cost_estimate=cost,
    )(x2d, w1_b, b1_f, w2_b, b2_f)

    # Drop batch padding and padded class columns.
    return out[:B, :d_out]


if __name__ == "__main__":
    # Small shapes consistent with the module: NCHW input flattened to dim_in.
    B, C, H, W = 2, 4, 16, 16
    dim_in = C * H * W          # 1024
    dim_hidden = 32
    dim_out = 10

    key = jax.random.PRNGKey(0)
    kx, k1, k2, k3, k4 = jax.random.split(key, 5)

    x = jax.random.normal(kx, (B, C, H, W), dtype=jnp.float32)

    # PyTorch Linear stores weight as [out, in]; kernel keeps the transposed
    # [in, out] layout so the hot path is a plain x @ W matmul on the MXU.
    w1 = jax.random.normal(k1, (dim_in, dim_hidden), dtype=jnp.float32) / jnp.sqrt(dim_in)
    b1 = jax.random.normal(k2, (dim_hidden,), dtype=jnp.float32) * 0.01
    w2 = jax.random.normal(k3, (dim_hidden, dim_out), dtype=jnp.float32) / jnp.sqrt(dim_hidden)
    b2 = jax.random.normal(k4, (dim_out,), dtype=jnp.float32) * 0.01

    out = jax.block_until_ready(mlp_forward(x, w1, b1, w2, b2))

    # Pure-JAX f32 reference (eval mode: dropout == identity).
    x2d = x.reshape(B, dim_in)
    ref = jax.nn.softmax(jnp.maximum(x2d @ w1 + b1, 0.0) @ w2 + b2, axis=1)

    assert out.shape == (B, dim_out)
    assert bool(jnp.all(jnp.isfinite(out)))
    assert jnp.allclose(jnp.sum(out, axis=1), 1.0, atol=2e-2)   # approx-recip slack
    assert jnp.allclose(out, ref, atol=3e-2)                    # bf16 matmul slack

    print("KERNEL_OK")
</pallas_src>

<mosaic_0001>
module attributes {stable_mosaic.version = 11 : i64} {
  func.func @_mlp_kernel(%arg0: i32, %arg1: memref<8x1024xbf16, #tpu.memory_space<vmem>>, %arg2: memref<1024x32xbf16, #tpu.memory_space<vmem>>, %arg3: memref<1x32xf32, #tpu.memory_space<vmem>>, %arg4: memref<32x128xbf16, #tpu.memory_space<vmem>>, %arg5: memref<1x128xf32, #tpu.memory_space<vmem>>, %arg6: memref<8x128xf32, #tpu.memory_space<vmem>>) attributes {dimension_semantics = [#tpu.dimension_semantics<parallel>], iteration_bounds = array<i64: 1>, scalar_prefetch = 0 : i64, scratch_operands = 0 : i64, tpu.core_type = #tpu.core_type<tc>, window_params = [{transform_indices = @transform_0, window_bounds = array<i64: 8, 1024>}, {pipeline_mode = #tpu.pipeline_mode<synchronous>, transform_indices = @transform_1, window_bounds = array<i64: 1024, 32>}, {pipeline_mode = #tpu.pipeline_mode<synchronous>, transform_indices = @transform_2, window_bounds = array<i64: 1, 32>}, {pipeline_mode = #tpu.pipeline_mode<synchronous>, transform_indices = @transform_3, window_bounds = array<i64: 32, 128>}, {pipeline_mode = #tpu.pipeline_mode<synchronous>, transform_indices = @transform_4, window_bounds = array<i64: 1, 128>}, {transform_indices = @transform_5, window_bounds = array<i64: 8, 128>}]} {
    %c0 = arith.constant 0 : index
    %c0_0 = arith.constant 0 : index
    %0 = vector.load %arg1[%c0, %c0_0] : memref<8x1024xbf16, #tpu.memory_space<vmem>>, vector<8x1024xbf16>
    %c0_1 = arith.constant 0 : index
    %c0_2 = arith.constant 0 : index
    %1 = vector.load %arg2[%c0_1, %c0_2] : memref<1024x32xbf16, #tpu.memory_space<vmem>>, vector<1024x32xbf16>
    %cst = arith.constant dense<0.000000e+00> : vector<8x32xf32>
    %2 = tpu.matmul %0, %1, %cst {dimension_numbers = #tpu.dot_dimension_numbers<[1], [0], [0], [1], [0, 0, 1, 1], [], []>} : vector<8x1024xbf16>, vector<1024x32xbf16>, vector<8x32xf32> -> vector<8x32xf32>
    %c0_3 = arith.constant 0 : index
    %c0_4 = arith.constant 0 : index
    %3 = vector.load %arg3[%c0_3, %c0_4] : memref<1x32xf32, #tpu.memory_space<vmem>>, vector<1x32xf32>
    %4 = vector.broadcast %3 : vector<1x32xf32> to vector<8x32xf32>
    %5 = arith.addf %2, %4 : vector<8x32xf32>
    %cst_5 = arith.constant 0.000000e+00 : f32
    %6 = vector.broadcast %cst_5 : f32 to vector<8x32xf32>
    %7 = arith.maximumf %5, %6 : vector<8x32xf32>
    %8 = arith.truncf %7 : vector<8x32xf32> to vector<8x32xbf16>
    %c0_6 = arith.constant 0 : index
    %c0_7 = arith.constant 0 : index
    %9 = vector.load %arg4[%c0_6, %c0_7] : memref<32x128xbf16, #tpu.memory_space<vmem>>, vector<32x128xbf16>
    %cst_8 = arith.constant dense<0.000000e+00> : vector<8x128xf32>
    %10 = tpu.matmul %8, %9, %cst_8 {dimension_numbers = #tpu.dot_dimension_numbers<[1], [0], [0], [1], [0, 0, 1, 1], [], []>} : vector<8x32xbf16>, vector<32x128xbf16>, vector<8x128xf32> -> vector<8x128xf32>
    %c0_9 = arith.constant 0 : index
    %c0_10 = arith.constant 0 : index
    %11 = vector.load %arg5[%c0_9, %c0_10] : memref<1x128xf32, #tpu.memory_space<vmem>>, vector<1x128xf32>
    %12 = vector.broadcast %11 : vector<1x128xf32> to vector<8x128xf32>
    %13 = arith.addf %10, %12 : vector<8x128xf32>
    %cst_11 = arith.constant dense<0xFF800000> : vector<8xf32>
    %14 = vector.multi_reduction <maximumf>, %13, %cst_11 [1] : vector<8x128xf32> to vector<8xf32>
    %15 = vector.shape_cast %14 : vector<8xf32> to vector<8x1xf32>
    %16 = vector.broadcast %15 : vector<8x1xf32> to vector<8x128xf32>
    %17 = arith.subf %13, %16 : vector<8x128xf32>
    %18 = math.exp %17 : vector<8x128xf32>
    %cst_12 = arith.constant dense<0.000000e+00> : vector<8xf32>
    %19 = vector.multi_reduction <add>, %18, %cst_12 [1] : vector<8x128xf32> to vector<8xf32>
    %20 = vector.shape_cast %19 : vector<8xf32> to vector<8x1xf32>
    %21 = tpu.reciprocal %20 {approx = true} : vector<8x1xf32> -> vector<8x1xf32>
    %22 = vector.broadcast %21 : vector<8x1xf32> to vector<8x128xf32>
    %23 = arith.mulf %18, %22 : vector<8x128xf32>
    %c0_13 = arith.constant 0 : index
    %c0_14 = arith.constant 0 : index
    %24 = vector.load %arg6[%c0_13, %c0_14] : memref<8x128xf32, #tpu.memory_space<vmem>>, vector<8x128xf32>
    tpu.vector_store %arg6[%c0_13, %c0_14], %23 {strides = array<i32>} : memref<8x128xf32, #tpu.memory_space<vmem>>, vector<8x128xf32>,
    return
  }
  func.func @transform_0(%arg0: i32) -> (i32, i32) {
    %c0_i32 = arith.constant 0 : i32
    %c0_i32_0 = arith.constant 0 : i32
    return %arg0, %c0_i32 : i32, i32
  }
  func.func @transform_1(%arg0: i32) -> (i32, i32) {
    %c0_i32 = arith.constant 0 : i32
    %c0_i32_0 = arith.constant 0 : i32
    %c0_i32_1 = arith.constant 0 : i32
    return %c0_i32, %c0_i32_0 : i32, i32
  }
  func.func @transform_2(%arg0: i32) -> (i32, i32) {
    %c0_i32 = arith.constant 0 : i32
    %c0_i32_0 = arith.constant 0 : i32
    %c0_i32_1 = arith.constant 0 : i32
    return %c0_i32, %c0_i32_0 : i32, i32
  }
  func.func @transform_3(%arg0: i32) -> (i32, i32) {
    %c0_i32 = arith.constant 0 : i32
    %c0_i32_0 = arith.constant 0 : i32
    %c0_i32_1 = arith.constant 0 : i32
    return %c0_i32, %c0_i32_0 : i32, i32
  }
  func.func @transform_4(%arg0: i32) -> (i32, i32) {
    %c0_i32 = arith.constant 0 : i32
    %c0_i32_0 = arith.constant 0 : i32
    %c0_i32_1 = arith.constant 0 : i32
    return %c0_i32, %c0_i32_0 : i32, i32
  }
  func.func @transform_5(%arg0: i32) -> (i32, i32) {
    %c0_i32 = arith.constant 0 : i32
    %c0_i32_0 = arith.constant 0 : i32
    return %arg0, %c0_i32 : i32, i32
  }
}

</mosaic_0001>

<llo_original>
// kernel: tpu_custom_call.1
$region0: #{tpu_custom_call.1}
  #allocation0 [shape = 'u32[]', space=smem, size = 0x4, offset = 0x4, fixed_abs, tag = 'smem constant byte address 0x4 - core index']
  #allocation1 [shape = 'u32[72,128]{1,0:T(1,128)}', space=vmem, size = 0x9000, scoped, tag = 'internal scratch']
  %s0 = inlined_call_operand.vmem [shape: bf16[8,1024], index: 0, kind: input, shape index: {}]
  %s1 = inlined_call_operand.vmem [shape: bf16[1024,32], index: 1, kind: input, shape index: {}]
  %s2 = inlined_call_operand.vmem [shape: f32[1,32], index: 2, kind: input, shape index: {}]
  %s3 = inlined_call_operand.vmem [shape: bf16[32,128], index: 3, kind: input, shape index: {}]
  %s4 = inlined_call_operand.vmem [shape: f32[1,128], index: 4, kind: input, shape index: {}]
  %s5 = inlined_call_operand.hbm [shape: f32[8,128], index: 5, kind: output, shape index: {}]
  %s6 = sld [smem:[#allocation0]]
  $region30: #{tpu_custom_call.1} parent=0
    _
  %s8 = ssub.s32 1, %s6
  %s9 = scalar_select 0, %s8, %s6
  $region1: #{tpu_custom_call.1} parent=0
    #allocation2 [shape = 'u8[4096]{0}', space=vmem, size = 0x1000, scoped, tag = 'output window, operand 0, single buffered']
    #allocation3 [shape = 's32[1]{0}', space=sflag, size = 0x4, scoped, tag = 'scoped memory for tpu_custom_call.1']
    %10 = vsyncpa [#allocation3], 0
    // Predicated region
    $region2: #{tpu_custom_call.1} parent=1 // pred_check
      _
    $region3: #{tpu_custom_call.1} parent=1 // pred_check_branch
      %12 = sbr.rel (0) target = $region5
    $region4: #{tpu_custom_call.1} parent=1 // pred_region
      _
    $region5: #{tpu_custom_call.1} parent=1 // pred_fallthru
      _
    // Predicated region
    $region6: #{tpu_custom_call.1} parent=1 // pred_check
      _
    $region7: #{tpu_custom_call.1} parent=1 // pred_check_branch
      %14 = sbr.rel (0) target = $region9
    $region8: #{tpu_custom_call.1} parent=1 // pred_region
      _
    $region9: #{tpu_custom_call.1} parent=1 // pred_fallthru
      _
    // Predicated region
    $region10: #{tpu_custom_call.1} parent=1 // pred_check
      _
    $region11: #{tpu_custom_call.1} parent=1 // pred_check_branch
      %16 = sbr.rel (0) target = $region13
    $region12: #{tpu_custom_call.1} parent=1 // pred_region
      _
    $region13: #{tpu_custom_call.1} parent=1 // pred_fallthru
      _
    // Predicated region
    $region14: #{tpu_custom_call.1} parent=1 // pred_check
      _
    $region15: #{tpu_custom_call.1} parent=1 // pred_check_branch
      %18 = sbr.rel (0) target = $region17
    $region16: #{tpu_custom_call.1} parent=1 // pred_region
      _
    $region17: #{tpu_custom_call.1} parent=1 // pred_fallthru
      _
    // Predicated region
    $region18: #{tpu_custom_call.1} parent=1 // pred_check
      _
    $region19: #{tpu_custom_call.1} parent=1 // pred_check_branch
      %20 = sbr.rel (0) target = $region21
    $region20: #{tpu_custom_call.1} parent=1 // pred_region
      _
    $region21: #{tpu_custom_call.1} parent=1 // pred_fallthru
      _
    %v22 = vld [vmem:[%s0] sm:$0xff]
    %v23 = vld [vmem:[%s0 + $0x8] sm:$0xff]
    %v24 = vld [vmem:[%s0 + $0x10] sm:$0xff]
    %v25 = vld [vmem:[%s0 + $0x18] sm:$0xff]
    %v26 = vld [vmem:[%s1] sm:$0xf]
    %v27 = vld [vmem:[%s1 + $0x4] sm:$0xf]
    %v28 = vld [vmem:[%s1 + $0x8] sm:$0xf]
    %v29 = vld [vmem:[%s1 + $0xc] sm:$0xf]
    %v30 = vld [vmem:[%s1 + $0x10] sm:$0xf]
    %v31 = vld [vmem:[%s1 + $0x14] sm:$0xf]
    %v32 = vld [vmem:[%s1 + $0x18] sm:$0xf]
    %v33 = vld [vmem:[%s1 + $0x1c] sm:$0xf]
    %v34 = vld [vmem:[%s1 + $0x20] sm:$0xf]
    %v35 = vld [vmem:[%s1 + $0x24] sm:$0xf]
    %v36 = vld [vmem:[%s1 + $0x28] sm:$0xf]
    %v37 = vld [vmem:[%s1 + $0x2c] sm:$0xf]
    %v38 = vld [vmem:[%s1 + $0x30] sm:$0xf]
    %v39 = vld [vmem:[%s1 + $0x34] sm:$0xf]
    %v40 = vld [vmem:[%s1 + $0x38] sm:$0xf]
    %v41 = vld [vmem:[%s1 + $0x3c] sm:$0xf]
    %v42 = vld [vmem:[%s1 + $0x40] sm:$0xf]
    %v43 = vld [vmem:[%s1 + $0x44] sm:$0xf]
    %v44 = vld [vmem:[%s1 + $0x48] sm:$0xf]
    %v45 = vld [vmem:[%s1 + $0x4c] sm:$0xf]
    %v46 = vld [vmem:[%s1 + $0x50] sm:$0xf]
    %v47 = vld [vmem:[%s1 + $0x54] sm:$0xf]
    %v48 = vld [vmem:[%s1 + $0x58] sm:$0xf]
    %v49 = vld [vmem:[%s1 + $0x5c] sm:$0xf]
    %v50 = vld [vmem:[%s1 + $0x60] sm:$0xf]
    %v51 = vld [vmem:[%s1 + $0x64] sm:$0xf]
    %v52 = vld [vmem:[%s1 + $0x68] sm:$0xf]
    %v53 = vld [vmem:[%s1 + $0x6c] sm:$0xf]
    %v54 = vld [vmem:[%s1 + $0x70] sm:$0xf]
    %v55 = vld [vmem:[%s1 + $0x74] sm:$0xf]
    %v56 = vld [vmem:[%s1 + $0x78] sm:$0xf]
    %v57 = vld [vmem:[%s1 + $0x7c] sm:$0xf]
    %v58 = vld [vmem:[%s1 + $0x80] sm:$0xf]
    %v59 = vld [vmem:[%s1 + $0x84] sm:$0xf]
    %v60 = vld [vmem:[%s1 + $0x88] sm:$0xf]
    %v61 = vld [vmem:[%s1 + $0x8c] sm:$0xf]
    %v62 = vld [vmem:[%s1 + $0x90] sm:$0xf]
    %v63 = vld [vmem:[%s1 + $0x94] sm:$0xf]
    %v64 = vld [vmem:[%s1 + $0x98] sm:$0xf]
    %v65 = vld [vmem:[%s1 + $0x9c] sm:$0xf]
    %v66 = vld [vmem:[%s1 + $0xa0] sm:$0xf]
    %v67 = vld [vmem:[%s1 + $0xa4] sm:$0xf]
    %v68 = vld [vmem:[%s1 + $0xa8] sm:$0xf]
    %v69 = vld [vmem:[%s1 + $0xac] sm:$0xf]
    %v70 = vld [vmem:[%s1 + $0xb0] sm:$0xf]
    %v71 = vld [vmem:[%s1 + $0xb4] sm:$0xf]
    %v72 = vld [vmem:[%s1 + $0xb8] sm:$0xf]
    %v73 = vld [vmem:[%s1 + $0xbc] sm:$0xf]
    %v74 = vld [vmem:[%s1 + $0xc0] sm:$0xf]
    %v75 = vld [vmem:[%s1 + $0xc4] sm:$0xf]
    %v76 = vld [vmem:[%s1 + $0xc8] sm:$0xf]
    %v77 = vld [vmem:[%s1 + $0xcc] sm:$0xf]
    %v78 = vld [vmem:[%s1 + $0xd0] sm:$0xf]
    %v79 = vld [vmem:[%s1 + $0xd4] sm:$0xf]
    %v80 = vld [vmem:[%s1 + $0xd8] sm:$0xf]
    %v81 = vld [vmem:[%s1 + $0xdc] sm:$0xf]
    %v82 = vld [vmem:[%s1 + $0xe0] sm:$0xf]
    %v83 = vld [vmem:[%s1 + $0xe4] sm:$0xf]
    %v84 = vld [vmem:[%s1 + $0xe8] sm:$0xf]
    %v85 = vld [vmem:[%s1 + $0xec] sm:$0xf]
    %v86 = vld [vmem:[%s1 + $0xf0] sm:$0xf]
    %v87 = vld [vmem:[%s1 + $0xf4] sm:$0xf]
    %v88 = vld [vmem:[%s1 + $0xf8] sm:$0xf]
    %v89 = vld [vmem:[%s1 + $0xfc] sm:$0xf]
    %v90 = vld [vmem:[%s1 + $0x100] sm:$0xf]
    %v91 = vld [vmem:[%s1 + $0x104] sm:$0xf]
    %v92 = vld [vmem:[%s1 + $0x108] sm:$0xf]
    %v93 = vld [vmem:[%s1 + $0x10c] sm:$0xf]
    %v94 = vld [vmem:[%s1 + $0x110] sm:$0xf]
    %v95 = vld [vmem:[%s1 + $0x114] sm:$0xf]
    %v96 = vld [vmem:[%s1 + $0x118] sm:$0xf]
    %v97 = vld [vmem:[%s1 + $0x11c] sm:$0xf]
    %v98 = vld [vmem:[%s1 + $0x120] sm:$0xf]
    %v99 = vld [vmem:[%s1 + $0x124] sm:$0xf]
    %v100 = vld [vmem:[%s1 + $0x128] sm:$0xf]
    %v101 = vld [vmem:[%s1 + $0x12c] sm:$0xf]
    %v102 = vld [vmem:[%s1 + $0x130] sm:$0xf]
    %v103 = vld [vmem:[%s1 + $0x134] sm:$0xf]
    %v104 = vld [vmem:[%s1 + $0x138] sm:$0xf]
    %v105 = vld [vmem:[%s1 + $0x13c] sm:$0xf]
    %v106 = vld [vmem:[%s1 + $0x140] sm:$0xf]
    %v107 = vld [vmem:[%s1 + $0x144] sm:$0xf]
    %v108 = vld [vmem:[%s1 + $0x148] sm:$0xf]
    %v109 = vld [vmem:[%s1 + $0x14c] sm:$0xf]
    %v110 = vld [vmem:[%s1 + $0x150] sm:$0xf]
    %v111 = vld [vmem:[%s1 + $0x154] sm:$0xf]
    %v112 = vld [vmem:[%s1 + $0x158] sm:$0xf]
    %v113 = vld [vmem:[%s1 + $0x15c] sm:$0xf]
    %v114 = vld [vmem:[%s1 + $0x160] sm:$0xf]
    %v115 = vld [vmem:[%s1 + $0x164] sm:$0xf]
    %v116 = vld [vmem:[%s1 + $0x168] sm:$0xf]
    %v117 = vld [vmem:[%s1 + $0x16c] sm:$0xf]
    %v118 = vld [vmem:[%s1 + $0x170] sm:$0xf]
    %v119 = vld [vmem:[%s1 + $0x174] sm:$0xf]
    %v120 = vld [vmem:[%s1 + $0x178] sm:$0xf]
    %v121 = vld [vmem:[%s1 + $0x17c] sm:$0xf]
    %v122 = vld [vmem:[%s1 + $0x180] sm:$0xf]
    %v123 = vld [vmem:[%s1 + $0x184] sm:$0xf]
    %v124 = vld [vmem:[%s1 + $0x188] sm:$0xf]
    %v125 = vld [vmem:[%s1 + $0x18c] sm:$0xf]
    %v126 = vld [vmem:[%s1 + $0x190] sm:$0xf]
    %v127 = vld [vmem:[%s1 + $0x194] sm:$0xf]
    %v128 = vld [vmem:[%s1 + $0x198] sm:$0xf]
    %v129 = vld [vmem:[%s1 + $0x19c] sm:$0xf]
    %v130 = vld [vmem:[%s1 + $0x1a0] sm:$0xf]
    %v131 = vld [vmem:[%s1 + $0x1a4] sm:$0xf]
    %v132 = vld [vmem:[%s1 + $0x1a8] sm:$0xf]
    %v133 = vld [vmem:[%s1 + $0x1ac] sm:$0xf]
    %v134 = vld [vmem:[%s1 + $0x1b0] sm:$0xf]
    %v135 = vld [vmem:[%s1 + $0x1b4] sm:$0xf]
    %v136 = vld [vmem:[%s1 + $0x1b8] sm:$0xf]
    %v137 = vld [vmem:[%s1 + $0x1bc] sm:$0xf]
    %v138 = vld [vmem:[%s1 + $0x1c0] sm:$0xf]
    %v139 = vld [vmem:[%s1 + $0x1c4] sm:$0xf]
    %v140 = vld [vmem:[%s1 + $0x1c8] sm:$0xf]
    %v141 = vld [vmem:[%s1 + $0x1cc] sm:$0xf]
    %v142 = vld [vmem:[%s1 + $0x1d0] sm:$0xf]
    %v143 = vld [vmem:[%s1 + $0x1d4] sm:$0xf]
    %v144 = vld [vmem:[%s1 + $0x1d8] sm:$0xf]
    %v145 = vld [vmem:[%s1 + $0x1dc] sm:$0xf]
    %v146 = vld [vmem:[%s1 + $0x1e0] sm:$0xf]
    %v147 = vld [vmem:[%s1 + $0x1e4] sm:$0xf]
    %v148 = vld [vmem:[%s1 + $0x1e8] sm:$0xf]
    %v149 = vld [vmem:[%s1 + $0x1ec] sm:$0xf]
    %v150 = vld [vmem:[%s1 + $0x1f0] sm:$0xf]
    %v151 = vld [vmem:[%s1 + $0x1f4] sm:$0xf]
    %v152 = vld [vmem:[%s1 + $0x1f8] sm:$0xf]
    %v153 = vld [vmem:[%s1 + $0x1fc] sm:$0xf]
    %v154 = vld [vmem:[%s2] sm:$0x1]
    %v156 = vperm.slane %v154, 0
    %v162 = vunpack.c.l.b16 %v22
    %v163 = vunpack.c.h.b16 %v22
    %v164 = vunpack.c.l.b16 %v23
    %v165 = vunpack.c.h.b16 %v23
    %v166 = vunpack.c.l.b16 %v24
    %v167 = vunpack.c.h.b16 %v24
    %v168 = vunpack.c.l.b16 %v25
    %v169 = vunpack.c.h.b16 %v25
    %v170 = vpack.c.b16 %v162, %v162
    %v171 = vpack.c.b16 %v163, %v163
    %v172 = vpack.c.b16 %v164, %v164
    %v173 = vpack.c.b16 %v165, %v165
    %v174 = vpack.c.b16 %v166, %v166
    %v175 = vpack.c.b16 %v167, %v167
    %v176 = vpack.c.b16 %v168, %v168
    %v177 = vpack.c.b16 %v169, %v169
    %v314 = vunpack.c.l.b16 %v26
    %v315 = vunpack.c.l.b16 %v27
    %v316 = vunpack.c.l.b16 %v28
    %v317 = vunpack.c.l.b16 %v29
    %v318 = vunpack.c.l.b16 %v30
    %v319 = vunpack.c.l.b16 %v31
    %v320 = vunpack.c.l.b16 %v32
    %v321 = vunpack.c.l.b16 %v33
    %v322 = vunpack.c.l.b16 %v34
    %v323 = vunpack.c.l.b16 %v35
    %v324 = vunpack.c.l.b16 %v36
    %v325 = vunpack.c.l.b16 %v37
    %v326 = vunpack.c.l.b16 %v38
    %v327 = vunpack.c.l.b16 %v39
    %v328 = vunpack.c.l.b16 %v40
    %v329 = vunpack.c.l.b16 %v41
    %v330 = vunpack.c.l.b16 %v42
    %v331 = vunpack.c.l.b16 %v43
    %v332 = vunpack.c.l.b16 %v44
    %v333 = vunpack.c.l.b16 %v45
    %v334 = vunpack.c.l.b16 %v46
    %v335 = vunpack.c.l.b16 %v47
    %v336 = vunpack.c.l.b16 %v48
    %v337 = vunpack.c.l.b16 %v49
    %v338 = vunpack.c.l.b16 %v50
    %v339 = vunpack.c.l.b16 %v51
    %v340 = vunpack.c.l.b16 %v52
    %v341 = vunpack.c.l.b16 %v53
    %v342 = vunpack.c.l.b16 %v54
    %v343 = vunpack.c.l.b16 %v55
    %v344 = vunpack.c.l.b16 %v56
    %v345 = vunpack.c.l.b16 %v57
    %v346 = vunpack.c.l.b16 %v58
    %v347 = vunpack.c.l.b16 %v59
    %v348 = vunpack.c.l.b16 %v60
    %v349 = vunpack.c.l.b16 %v61
    %v350 = vunpack.c.l.b16 %v62
    %v351 = vunpack.c.l.b16 %v63
    %v352 = vunpack.c.l.b16 %v64
    %v353 = vunpack.c.l.b16 %v65
    %v354 = vunpack.c.l.b16 %v66
    %v355 = vunpack.c.l.b16 %v67
    %v356 = vunpack.c.l.b16 %v68
    %v357 = vunpack.c.l.b16 %v69
    %v358 = vunpack.c.l.b16 %v70
    %v359 = vunpack.c.l.b16 %v71
    %v360 = vunpack.c.l.b16 %v72
    %v361 = vunpack.c.l.b16 %v73
    %v362 = vunpack.c.l.b16 %v74
    %v363 = vunpack.c.l.b16 %v75
    %v364 = vunpack.c.l.b16 %v76
    %v365 = vunpack.c.l.b16 %v77
    %v366 = vunpack.c.l.b16 %v78
    %v367 = vunpack.c.l.b16 %v79
    %v368 = vunpack.c.l.b16 %v80
    %v369 = vunpack.c.l.b16 %v81
    %v370 = vunpack.c.l.b16 %v82
    %v371 = vunpack.c.l.b16 %v83
    %v372 = vunpack.c.l.b16 %v84
    %v373 = vunpack.c.l.b16 %v85
    %v374 = vunpack.c.l.b16 %v86
    %v375 = vunpack.c.l.b16 %v87
    %v376 = vunpack.c.l.b16 %v88
    %v377 = vunpack.c.l.b16 %v89
    %v378 = vunpack.c.l.b16 %v90
    %v379 = vunpack.c.l.b16 %v91
    %v380 = vunpack.c.l.b16 %v92
    %v381 = vunpack.c.l.b16 %v93
    %v382 = vunpack.c.l.b16 %v94
    %v383 = vunpack.c.l.b16 %v95
    %v384 = vunpack.c.l.b16 %v96
    %v385 = vunpack.c.l.b16 %v97
    %v386 = vunpack.c.l.b16 %v98
    %v387 = vunpack.c.l.b16 %v99
    %v388 = vunpack.c.l.b16 %v100
    %v389 = vunpack.c.l.b16 %v101
    %v390 = vunpack.c.l.b16 %v102
    %v391 = vunpack.c.l.b16 %v103
    %v392 = vunpack.c.l.b16 %v104
    %v393 = vunpack.c.l.b16 %v105
    %v394 = vunpack.c.l.b16 %v106
    %v395 = vunpack.c.l.b16 %v107
    %v396 = vunpack.c.l.b16 %v108
    %v397 = vunpack.c.l.b16 %v109
    %v398 = vunpack.c.l.b16 %v110
    %v399 = vunpack.c.l.b16 %v111
    %v400 = vunpack.c.l.b16 %v112
    %v401 = vunpack.c.l.b16 %v113
    %v402 = vunpack.c.l.b16 %v114
    %v403 = vunpack.c.l.b16 %v115
    %v404 = vunpack.c.l.b16 %v116
    %v405 = vunpack.c.l.b16 %v117
    %v406 = vunpack.c.l.b16 %v118
    %v407 = vunpack.c.l.b16 %v119
    %v408 = vunpack.c.l.b16 %v120
    %v409 = vunpack.c.l.b16 %v121
    %v410 = vunpack.c.l.b16 %v122
    %v411 = vunpack.c.l.b16 %v123
    %v412 = vunpack.c.l.b16 %v124
    %v413 = vunpack.c.l.b16 %v125
    %v414 = vunpack.c.l.b16 %v126
    %v415 = vunpack.c.l.b16 %v127
    %v416 = vunpack.c.l.b16 %v128
    %v417 = vunpack.c.l.b16 %v129
    %v418 = vunpack.c.l.b16 %v130
    %v419 = vunpack.c.l.b16 %v131
    %v420 = vunpack.c.l.b16 %v132
    %v421 = vunpack.c.l.b16 %v133
    %v422 = vunpack.c.l.b16 %v134
    %v423 = vunpack.c.l.b16 %v135
    %v424 = vunpack.c.l.b16 %v136
    %v425 = vunpack.c.l.b16 %v137
    %v426 = vunpack.c.l.b16 %v138
    %v427 = vunpack.c.l.b16 %v139
    %v428 = vunpack.c.l.b16 %v140
    %v429 = vunpack.c.l.b16 %v141
    %v430 = vunpack.c.l.b16 %v142
    %v431 = vunpack.c.l.b16 %v143
    %v432 = vunpack.c.l.b16 %v144
    %v433 = vunpack.c.l.b16 %v145
    %v434 = vunpack.c.l.b16 %v146
    %v435 = vunpack.c.l.b16 %v147
    %v436 = vunpack.c.l.b16 %v148
    %v437 = vunpack.c.l.b16 %v149
    %v438 = vunpack.c.l.b16 %v150
    %v439 = vunpack.c.l.b16 %v151
    %v440 = vunpack.c.l.b16 %v152
    %v441 = vunpack.c.l.b16 %v153
    %v442 = vpack.c.b16 %v315, %v314
    %v443 = vpack.c.b16 %v317, %v316
    %v444 = vpack.c.b16 %v319, %v318
    %v445 = vpack.c.b16 %v321, %v320
    %v446 = vpack.c.b16 %v323, %v322
    %v447 = vpack.c.b16 %v325, %v324
    %v448 = vpack.c.b16 %v327, %v326
    %v449 = vpack.c.b16 %v329, %v328
    %v450 = vpack.c.b16 %v331, %v330
    %v451 = vpack.c.b16 %v333, %v332
    %v452 = vpack.c.b16 %v335, %v334
    %v453 = vpack.c.b16 %v337, %v336
    %v454 = vpack.c.b16 %v339, %v338
    %v455 = vpack.c.b16 %v341, %v340
    %v456 = vpack.c.b16 %v343, %v342
    %v457 = vpack.c.b16 %v345, %v344
    %v458 = vpack.c.b16 %v347, %v346
    %v459 = vpack.c.b16 %v349, %v348
    %v460 = vpack.c.b16 %v351, %v350
    %v461 = vpack.c.b16 %v353, %v352
    %v462 = vpack.c.b16 %v355, %v354
    %v463 = vpack.c.b16 %v357, %v356
    %v464 = vpack.c.b16 %v359, %v358
    %v465 = vpack.c.b16 %v361, %v360
    %v466 = vpack.c.b16 %v363, %v362
    %v467 = vpack.c.b16 %v365, %v364
    %v468 = vpack.c.b16 %v367, %v366
    %v469 = vpack.c.b16 %v369, %v368
    %v470 = vpack.c.b16 %v371, %v370
    %v471 = vpack.c.b16 %v373, %v372
    %v472 = vpack.c.b16 %v375, %v374
    %v473 = vpack.c.b16 %v377, %v376
    %v474 = vpack.c.b16 %v379, %v378
    %v475 = vpack.c.b16 %v381, %v380
    %v476 = vpack.c.b16 %v383, %v382
    %v477 = vpack.c.b16 %v385, %v384
    %v478 = vpack.c.b16 %v387, %v386
    %v479 = vpack.c.b16 %v389, %v388
    %v480 = vpack.c.b16 %v391, %v390
    %v481 = vpack.c.b16 %v393, %v392
    %v482 = vpack.c.b16 %v395, %v394
    %v483 = vpack.c.b16 %v397, %v396
    %v484 = vpack.c.b16 %v399, %v398
    %v485 = vpack.c.b16 %v401, %v400
    %v486 = vpack.c.b16 %v403, %v402
    %v487 = vpack.c.b16 %v405, %v404
    %v488 = vpack.c.b16 %v407, %v406
    %v489 = vpack.c.b16 %v409, %v408
    %v490 = vpack.c.b16 %v411, %v410
    %v491 = vpack.c.b16 %v413, %v412
    %v492 = vpack.c.b16 %v415, %v414
    %v493 = vpack.c.b16 %v417, %v416
    %v494 = vpack.c.b16 %v419, %v418
    %v495 = vpack.c.b16 %v421, %v420
    %v496 = vpack.c.b16 %v423, %v422
    %v497 = vpack.c.b16 %v425, %v424
    %v498 = vpack.c.b16 %v427, %v426
    %v499 = vpack.c.b16 %v429, %v428
    %v500 = vpack.c.b16 %v431, %v430
    %v501 = vpack.c.b16 %v433, %v432
    %v502 = vpack.c.b16 %v435, %v434
    %v503 = vpack.c.b16 %v437, %v436
    %v504 = vpack.c.b16 %v439, %v438
    %v505 = vpack.c.b16 %v441, %v440
    %570 = vmatpush.bf16.msra.mxu0 %v449
    %571 = vmatpush.bf16.msra.mxu0 %v448
    %572 = vmatpush.bf16.msra.mxu0 %v447
    %573 = vmatpush.bf16.msra.mxu0 %v446
    %574 = vmatpush.bf16.msra.mxu0 %v445
    %575 = vmatpush.bf16.msra.mxu0 %v444
    %576 = vmatpush.bf16.msra.mxu0 %v443
    %577 = vmatpush.bf16.msra.mxu0 %v442
    %578 = vmatmul.bf16.gmra.mxu0 %v170
    %v579 = vpop.f32.mrf.mxu0
    %v580 = vadd.f32 %v156, %v579
    %v581 = vpop.f32.mrf.mxu0
    %582 = vdwg.mxu0
    %583 = vmatpush.bf16.msra.mxu0 %v457
    %584 = vmatpush.bf16.msra.mxu0 %v456
    %585 = vmatpush.bf16.msra.mxu0 %v455
    %586 = vmatpush.bf16.msra.mxu0 %v454
    %587 = vmatpush.bf16.msra.mxu0 %v453
    %588 = vmatpush.bf16.msra.mxu0 %v452
    %589 = vmatpush.bf16.msra.mxu0 %v451
    %590 = vmatpush.bf16.msra.mxu0 %v450
    %591 = vmatmul.bf16.gmra.mxu0 %v171
    %v592 = vpop.f32.mrf.mxu0
    %v593 = vadd.f32 %v580, %v592
    %v594 = vpop.f32.mrf.mxu0
    %595 = vdwg.mxu0
    %596 = vmatpush.bf16.msra.mxu0 %v465
    %597 = vmatpush.bf16.msra.mxu0 %v464
    %598 = vmatpush.bf16.msra.mxu0 %v463
    %599 = vmatpush.bf16.msra.mxu0 %v462
    %600 = vmatpush.bf16.msra.mxu0 %v461
    %601 = vmatpush.bf16.msra.mxu0 %v460
    %602 = vmatpush.bf16.msra.mxu0 %v459
    %603 = vmatpush.bf16.msra.mxu0 %v458
    %604 = vmatmul.bf16.gmra.mxu0 %v172
    %v605 = vpop.f32.mrf.mxu0
    %v606 = vadd.f32 %v593, %v605
    %v607 = vpop.f32.mrf.mxu0
    %608 = vdwg.mxu0
    %609 = vmatpush.bf16.msra.mxu0 %v473
    %610 = vmatpush.bf16.msra.mxu0 %v472
    %611 = vmatpush.bf16.msra.mxu0 %v471
    %612 = vmatpush.bf16.msra.mxu0 %v470
    %613 = vmatpush.bf16.msra.mxu0 %v469
    %614 = vmatpush.bf16.msra.mxu0 %v468
    %615 = vmatpush.bf16.msra.mxu0 %v467
    %616 = vmatpush.bf16.msra.mxu0 %v466
    %617 = vmatmul.bf16.gmra.mxu0 %v173
    %v618 = vpop.f32.mrf.mxu0
    %v619 = vadd.f32 %v606, %v618
    %v620 = vpop.f32.mrf.mxu0
    %621 = vdwg.mxu0
    %622 = vmatpush.bf16.msra.mxu0 %v481
    %623 = vmatpush.bf16.msra.mxu0 %v480
    %624 = vmatpush.bf16.msra.mxu0 %v479
    %625 = vmatpush.bf16.msra.mxu0 %v478
    %626 = vmatpush.bf16.msra.mxu0 %v477
    %627 = vmatpush.bf16.msra.mxu0 %v476
    %628 = vmatpush.bf16.msra.mxu0 %v475
    %629 = vmatpush.bf16.msra.mxu0 %v474
    %630 = vmatmul.bf16.gmra.mxu0 %v174
    %v631 = vpop.f32.mrf.mxu0
    %v632 = vadd.f32 %v619, %v631
    %v633 = vpop.f32.mrf.mxu0
    %634 = vdwg.mxu0
    %635 = vmatpush.bf16.msra.mxu0 %v489
    %636 = vmatpush.bf16.msra.mxu0 %v488
    %637 = vmatpush.bf16.msra.mxu0 %v487
    %638 = vmatpush.bf16.msra.mxu0 %v486
    %639 = vmatpush.bf16.msra.mxu0 %v485
    %640 = vmatpush.bf16.msra.mxu0 %v484
    %641 = vmatpush.bf16.msra.mxu0 %v483
    %642 = vmatpush.bf16.msra.mxu0 %v482
    %643 = vmatmul.bf16.gmra.mxu0 %v175
    %v644 = vpop.f32.mrf.mxu0
    %v645 = vadd.f32 %v632, %v644
    %v646 = vpop.f32.mrf.mxu0
    %647 = vdwg.mxu0
    %648 = vmatpush.bf16.msra.mxu0 %v497
    %649 = vmatpush.bf16.msra.mxu0 %v496
    %650 = vmatpush.bf16.msra.mxu0 %v495
    %651 = vmatpush.bf16.msra.mxu0 %v494
    %652 = vmatpush.bf16.msra.mxu0 %v493
    %653 = vmatpush.bf16.msra.mxu0 %v492
    %654 = vmatpush.bf16.msra.mxu0 %v491
    %655 = vmatpush.bf16.msra.mxu0 %v490
    %656 = vmatmul.bf16.gmra.mxu0 %v176
    %v657 = vpop.f32.mrf.mxu0
    %v658 = vadd.f32 %v645, %v657
    %v659 = vpop.f32.mrf.mxu0
    %660 = vdwg.mxu0
    %661 = vmatpush.bf16.msra.mxu0 %v505
    %662 = vmatpush.bf16.msra.mxu0 %v504
    %663 = vmatpush.bf16.msra.mxu0 %v503
    %664 = vmatpush.bf16.msra.mxu0 %v502
    %665 = vmatpush.bf16.msra.mxu0 %v501
    %666 = vmatpush.bf16.msra.mxu0 %v500
    %667 = vmatpush.bf16.msra.mxu0 %v499
    %668 = vmatpush.bf16.msra.mxu0 %v498
    %669 = vmatmul.bf16.gmra.mxu0 %v177
    %v670 = vpop.f32.mrf.mxu0
    %v671 = vadd.f32 %v658, %v670
    %v672 = vpop.f32.mrf.mxu0
    %673 = vdwg.mxu0
    %v674 = vmax.f32 %v671, 0.0
    %v675 = vpack.c.bf16 %v674, %v674
    %v676 = vld [vmem:[%s3] sm:$0xf]
    %v677 = vld [vmem:[%s3 + $0x4] sm:$0xf]
    %v678 = vld [vmem:[%s3 + $0x8] sm:$0xf]
    %v679 = vld [vmem:[%s3 + $0xc] sm:$0xf]
    %v680 = vld [vmem:[%s4] sm:$0x1]
    %v682 = vperm.slane %v680, 0
    %v688 = vunpack.c.l.b16 %v676
    %v689 = vunpack.c.l.b16 %v677
    %v690 = vunpack.c.l.b16 %v678
    %v691 = vunpack.c.l.b16 %v679
    %v692 = vpack.c.b16 %v689, %v688
    %v693 = vpack.c.b16 %v691, %v690
    %vm696 = vcmask 261120
    %v698 = vsel %vm696, %v675, 0
    %700 = vmatpush.bf16.msra.mxu0 0
    %701 = vmatpush.bf16.msra.mxu0 0
    %702 = vmatpush.bf16.msra.mxu0 0
    %703 = vmatpush.bf16.msra.mxu0 0
    %704 = vmatpush.bf16.msra.mxu0 0
    %705 = vmatpush.bf16.msra.mxu0 0
    %706 = vmatpush.bf16.msra.mxu0 %v693
    %707 = vmatpush.bf16.msra.mxu0 %v692
    %708 = vmatmul.bf16.gmra.mxu0 %v698
    %v709 = vpop.f32.mrf.mxu0
    %v710 = vadd.f32 %v682, %v709
    %v711 = vpop.f32.mrf.mxu0
    %712 = vdwg.mxu0
    %713 = vmax.xlane.f32.xlu0 %v710
    %v714 = vpop.xlane.xlu0 %713
    %v715 = vsub.f32 %v710, %v714
    %v716 = vmul.f32 %v715, 1.442695
    %v717 = vpow.pop %v716
    %718 = vadd.xlane.f32.xlu0 %v717
    %v719 = vpop.xlane.xlu0 %718
    %v720 = vrcp.pop %v719
    %v721 = vmul.f32 %v717, %v720
    %722 = vst [vmem:[#allocation2] sm:$0xff] %v721
    // Predicated region
    $region22: #{tpu_custom_call.1} parent=1 // pred_check
      _
    $region23: #{tpu_custom_call.1} parent=1 // pred_check_branch
      %724 = sbr.rel (0) target = $region25
    $region24: #{tpu_custom_call.1} parent=1 // pred_region
      %726 = vsyncadd [#allocation3], 0
      %s728 = sshll.u32 [#allocation2], 4
      %s729 = int_to_ptr.vmem [resolvable:$true] %s728
      %s730 = sshll.u32 %s5, 4
      %s731 = int_to_ptr.hbm [resolvable:$true] %s730
      %733 = dma.vmem_to_hbm [thread:$0]  %s729, 128, %s731, [#allocation3]
    $region25: #{tpu_custom_call.1} parent=1 // pred_fallthru
      _
    // Predicated region
    $region26: #{tpu_custom_call.1} parent=1 // pred_check
      _
    $region27: #{tpu_custom_call.1} parent=1 // pred_check_branch
      %735 = sbr.rel (0) target = $region29
    $region28: #{tpu_custom_call.1} parent=1 // pred_region
      %737 = dma.done [#allocation3], 128
    $region29: #{tpu_custom_call.1} parent=1 // pred_fallthru
      _
    %738 = vsyncpa [#allocation3], 1

</llo_original>
